<compile_context>
chip_gen: v6e
topology: v6e:2x2x1
jax: 0.10.0
libtpu: 0.0.40
codegen_flags: <defaults>
</compile_context>

<pallas_src>
import jax
import jax.numpy as jnp
from jax.experimental import pallas as pl
from jax.experimental.pallas import tpu as pltpu

D_IN, H1, H2, H3, D_OUT = 93, 64, 32, 16, 9
MAX_BM = 4096   # max batch-tile rows (x tile @4096 rows f32 ~ 1.5 MB)


def _round_up(n, m):
    return ((n + m - 1) // m) * m


def _num_tensorcores():
    """Best-effort TensorCore count for the local chip (v7x=2, v5e/v6e=1)."""
    try:
        info = pltpu.get_tpu_info()
        for attr in ("num_cores", "core_count", "tensorcore_count",
                     "num_tensorcores", "cores_per_chip"):
            v = getattr(info, attr, None)
            if isinstance(v, int) and v > 0:
                return v
    except Exception:
        pass
    try:
        kind = jax.devices()[0].device_kind.lower()
        if "v7" in kind:
            return 2
    except Exception:
        pass
    return 1


_NUM_TC = _num_tensorcores()


def _choose_bm(b, num_cores):
    """Pick the batch-tile size (multiple of 8, capped at MAX_BM).

    Single-TC chips (v5e/v6e): one big tile — splitting only adds ~0.35us of
    per-step overhead with no megacore benefit.
    Multi-TC chips (v7x): aim for >= 2 grid steps per core so the 'parallel'
    axis both shards across cores and leaves room for software pipelining.
    """
    b8 = _round_up(max(b, 1), 8)
    if num_cores <= 1 or b8 <= 16:
        return max(min(MAX_BM, b8), 8)
    target_steps = 2 * num_cores
    bm = min(MAX_BM, _round_up(pl.cdiv(b8, target_steps), 8))
    return max(bm, 8)


def _mlp_kernel(x_ref, w1_ref, b1_ref, w2_ref, b2_ref, w3_ref, b3_ref,
                w4_ref, b4_ref, o_ref):
    # One batch tile through the whole MLP. Weights/biases are resident
    # (constant index_map).  Accumulation is always f32; activations are fed
    # back to the MXU in the weights' dtype (bf16 if params are bf16).
    cdt = w2_ref.dtype
    x = x_ref[...]

    h = jnp.dot(x, w1_ref[...], preferred_element_type=jnp.float32) + b1_ref[...]
    h = jnp.maximum(h, 0.0).astype(cdt)
    h = jnp.dot(h, w2_ref[...], preferred_element_type=jnp.float32) + b2_ref[...]
    h = jnp.maximum(h, 0.0).astype(cdt)
    h = jnp.dot(h, w3_ref[...], preferred_element_type=jnp.float32) + b3_ref[...]
    h = jnp.maximum(h, 0.0).astype(cdt)
    o = jnp.dot(h, w4_ref[...], preferred_element_type=jnp.float32) + b4_ref[...]
    o_ref[...] = o.astype(o_ref.dtype)


@jax.jit
def net_forward(x, params):
    """Equivalent of Net.forward. `x` may be any shape whose trailing dims
    flatten to 93 features (mirrors x.view(-1, 93))."""
    w1, b1, w2, b2, w3, b3, w4, b4 = params

    x2d = x.reshape(-1, D_IN)
    # Explicit dtype policy: keep bf16, cast everything else to f32.
    if x2d.dtype != jnp.bfloat16:
        x2d = x2d.astype(jnp.float32)
    b = x2d.shape[0]

    bm = _choose_bm(b, _NUM_TC)
    grid = (pl.cdiv(b, bm),)              # ragged last tile masked by Pallas

    full = lambda i: (0, 0)               # weights/biases: same block each step

    out = pl.pallas_call(
        _mlp_kernel,
        out_shape=jax.ShapeDtypeStruct((b, D_OUT), jnp.float32),
        grid_spec=pltpu.PrefetchScalarGridSpec(
            num_scalar_prefetch=0,
            grid=grid,
            in_specs=[
                pl.BlockSpec((bm, D_IN), lambda i: (i, 0)),   # x tile (streamed)
                pl.BlockSpec((D_IN, H1), full),               # W1 (resident)
                pl.BlockSpec((1, H1), full),                  # b1
                pl.BlockSpec((H1, H2), full),                 # W2
                pl.BlockSpec((1, H2), full),                  # b2
                pl.BlockSpec((H2, H3), full),                 # W3
                pl.BlockSpec((1, H3), full),                  # b3
                pl.BlockSpec((H3, D_OUT), full),              # W4 (unpadded, 9 cols)
                pl.BlockSpec((1, D_OUT), full),               # b4
            ],
            out_specs=pl.BlockSpec((bm, D_OUT), lambda i: (i, 0)),
        ),
        compiler_params=pltpu.CompilerParams(
            dimension_semantics=("parallel",),
            vmem_limit_bytes=32 * 1024 * 1024),
    )(x2d, w1, b1, w2, b2, w3, b3, w4, b4)

    return out


def init_params(key, dtype=jnp.float32):
    """Deterministic init matching nn.Linear default (U(-1/sqrt(fan_in), +)).
    Weights are stored transposed as (in_features, out_features).  Pass
    dtype=jnp.bfloat16 to take the bf16 weight/activation path."""
    params = []
    dims = [(D_IN, H1), (H1, H2), (H2, H3), (H3, D_OUT)]
    for (fan_in, fan_out) in dims:
        key, kw, kb = jax.random.split(key, 3)
        bound = 1.0 / jnp.sqrt(float(fan_in))
        w = jax.random.uniform(kw, (fan_in, fan_out), jnp.float32, -bound, bound)
        b = jax.random.uniform(kb, (1, fan_out), jnp.float32, -bound, bound)
        params += [w.astype(dtype), b.astype(dtype)]
    return tuple(params)


def _reference(x, params):
    w1, b1, w2, b2, w3, b3, w4, b4 = params
    h = x.reshape(-1, D_IN).astype(jnp.float32)
    h = jax.nn.relu(h @ w1.astype(jnp.float32) + b1.astype(jnp.float32))
    h = jax.nn.relu(h @ w2.astype(jnp.float32) + b2.astype(jnp.float32))
    h = jax.nn.relu(h @ w3.astype(jnp.float32) + b3.astype(jnp.float32))
    return h @ w4.astype(jnp.float32) + b4.astype(jnp.float32)


if __name__ == "__main__":
    key = jax.random.PRNGKey(0)
    kp, kx1, kx2 = jax.random.split(key, 3)
    params = init_params(kp)

    # Small exact-tile case.
    x_small = jax.random.normal(kx1, (16, D_IN), jnp.float32)
    out_small = net_forward(x_small, params)
    jax.block_until_ready(out_small)
    ref_small = _reference(x_small, params)
    assert out_small.shape == (16, D_OUT), out_small.shape
    assert jnp.allclose(out_small, ref_small, atol=2e-5, rtol=2e-5), \
        "mismatch vs reference (small batch)"

    # Ragged case: batch not a multiple of the tile, exercises the masked
    # last tile (no wrapper-side padding copy anywhere).
    x_big = jax.random.normal(kx2, (200, D_IN), jnp.float32)
    out_big = net_forward(x_big, params)
    jax.block_until_ready(out_big)
    ref_big = _reference(x_big, params)
    assert out_big.shape == (200, D_OUT), out_big.shape
    assert jnp.allclose(out_big, ref_big, atol=2e-5, rtol=2e-5), \
        "mismatch vs reference (ragged batch)"

    print("KERNEL_OK")
</pallas_src>

<mosaic_0001>
module attributes {stable_mosaic.version = 11 : i64} {
  func.func @_mlp_kernel(%arg0: i32, %arg1: memref<16x93xf32, #tpu.memory_space<vmem>>, %arg2: memref<93x64xf32, #tpu.memory_space<vmem>>, %arg3: memref<1x64xf32, #tpu.memory_space<vmem>>, %arg4: memref<64x32xf32, #tpu.memory_space<vmem>>, %arg5: memref<1x32xf32, #tpu.memory_space<vmem>>, %arg6: memref<32x16xf32, #tpu.memory_space<vmem>>, %arg7: memref<1x16xf32, #tpu.memory_space<vmem>>, %arg8: memref<16x9xf32, #tpu.memory_space<vmem>>, %arg9: memref<1x9xf32, #tpu.memory_space<vmem>>, %arg10: memref<16x9xf32, #tpu.memory_space<vmem>>) attributes {dimension_semantics = [#tpu.dimension_semantics<parallel>], iteration_bounds = array<i64: 1>, scalar_prefetch = 0 : i64, scratch_operands = 0 : i64, tpu.core_type = #tpu.core_type<tc>, window_params = [{transform_indices = @transform_0, window_bounds = array<i64: 16, 93>}, {pipeline_mode = #tpu.pipeline_mode<synchronous>, transform_indices = @transform_1, window_bounds = array<i64: 93, 64>}, {pipeline_mode = #tpu.pipeline_mode<synchronous>, transform_indices = @transform_2, window_bounds = array<i64: 1, 64>}, {pipeline_mode = #tpu.pipeline_mode<synchronous>, transform_indices = @transform_3, window_bounds = array<i64: 64, 32>}, {pipeline_mode = #tpu.pipeline_mode<synchronous>, transform_indices = @transform_4, window_bounds = array<i64: 1, 32>}, {pipeline_mode = #tpu.pipeline_mode<synchronous>, transform_indices = @transform_5, window_bounds = array<i64: 32, 16>}, {pipeline_mode = #tpu.pipeline_mode<synchronous>, transform_indices = @transform_6, window_bounds = array<i64: 1, 16>}, {pipeline_mode = #tpu.pipeline_mode<synchronous>, transform_indices = @transform_7, window_bounds = array<i64: 16, 9>}, {pipeline_mode = #tpu.pipeline_mode<synchronous>, transform_indices = @transform_8, window_bounds = array<i64: 1, 9>}, {transform_indices = @transform_9, window_bounds = array<i64: 16, 9>}]} {
    %c0 = arith.constant 0 : index
    %c0_0 = arith.constant 0 : index
    %0 = vector.load %arg1[%c0, %c0_0] : memref<16x93xf32, #tpu.memory_space<vmem>>, vector<16x93xf32>
    %c0_1 = arith.constant 0 : index
    %c0_2 = arith.constant 0 : index
    %1 = vector.load %arg2[%c0_1, %c0_2] : memref<93x64xf32, #tpu.memory_space<vmem>>, vector<93x64xf32>
    %cst = arith.constant dense<0.000000e+00> : vector<16x64xf32>
    %2 = tpu.matmul %0, %1, %cst {dimension_numbers = #tpu.dot_dimension_numbers<[1], [0], [0], [1], [0, 0, 1, 1], [], []>} : vector<16x93xf32>, vector<93x64xf32>, vector<16x64xf32> -> vector<16x64xf32>
    %c0_3 = arith.constant 0 : index
    %c0_4 = arith.constant 0 : index
    %3 = vector.load %arg3[%c0_3, %c0_4] : memref<1x64xf32, #tpu.memory_space<vmem>>, vector<1x64xf32>
    %4 = vector.broadcast %3 : vector<1x64xf32> to vector<16x64xf32>
    %5 = arith.addf %2, %4 : vector<16x64xf32>
    %cst_5 = arith.constant 0.000000e+00 : f32
    %6 = vector.broadcast %cst_5 : f32 to vector<16x64xf32>
    %7 = arith.maximumf %5, %6 : vector<16x64xf32>
    %c0_6 = arith.constant 0 : index
    %c0_7 = arith.constant 0 : index
    %8 = vector.load %arg4[%c0_6, %c0_7] : memref<64x32xf32, #tpu.memory_space<vmem>>, vector<64x32xf32>
    %cst_8 = arith.constant dense<0.000000e+00> : vector<16x32xf32>
    %9 = tpu.matmul %7, %8, %cst_8 {dimension_numbers = #tpu.dot_dimension_numbers<[1], [0], [0], [1], [0, 0, 1, 1], [], []>} : vector<16x64xf32>, vector<64x32xf32>, vector<16x32xf32> -> vector<16x32xf32>
    %c0_9 = arith.constant 0 : index
    %c0_10 = arith.constant 0 : index
    %10 = vector.load %arg5[%c0_9, %c0_10] : memref<1x32xf32, #tpu.memory_space<vmem>>, vector<1x32xf32>
    %11 = vector.broadcast %10 : vector<1x32xf32> to vector<16x32xf32>
    %12 = arith.addf %9, %11 : vector<16x32xf32>
    %cst_11 = arith.constant 0.000000e+00 : f32
    %13 = vector.broadcast %cst_11 : f32 to vector<16x32xf32>
    %14 = arith.maximumf %12, %13 : vector<16x32xf32>
    %c0_12 = arith.constant 0 : index
    %c0_13 = arith.constant 0 : index
    %15 = vector.load %arg6[%c0_12, %c0_13] : memref<32x16xf32, #tpu.memory_space<vmem>>, vector<32x16xf32>
    %cst_14 = arith.constant dense<0.000000e+00> : vector<16x16xf32>
    %16 = tpu.matmul %14, %15, %cst_14 {dimension_numbers = #tpu.dot_dimension_numbers<[1], [0], [0], [1], [0, 0, 1, 1], [], []>} : vector<16x32xf32>, vector<32x16xf32>, vector<16x16xf32> -> vector<16x16xf32>
    %c0_15 = arith.constant 0 : index
    %c0_16 = arith.constant 0 : index
    %17 = vector.load %arg7[%c0_15, %c0_16] : memref<1x16xf32, #tpu.memory_space<vmem>>, vector<1x16xf32>
    %18 = vector.broadcast %17 : vector<1x16xf32> to vector<16x16xf32>
    %19 = arith.addf %16, %18 : vector<16x16xf32>
    %cst_17 = arith.constant 0.000000e+00 : f32
    %20 = vector.broadcast %cst_17 : f32 to vector<16x16xf32>
    %21 = arith.maximumf %19, %20 : vector<16x16xf32>
    %c0_18 = arith.constant 0 : index
    %c0_19 = arith.constant 0 : index
    %22 = vector.load %arg8[%c0_18, %c0_19] : memref<16x9xf32, #tpu.memory_space<vmem>>, vector<16x9xf32>
    %cst_20 = arith.constant dense<0.000000e+00> : vector<16x9xf32>
    %23 = tpu.matmul %21, %22, %cst_20 {dimension_numbers = #tpu.dot_dimension_numbers<[1], [0], [0], [1], [0, 0, 1, 1], [], []>} : vector<16x16xf32>, vector<16x9xf32>, vector<16x9xf32> -> vector<16x9xf32>
    %c0_21 = arith.constant 0 : index
    %c0_22 = arith.constant 0 : index
    %24 = vector.load %arg9[%c0_21, %c0_22] : memref<1x9xf32, #tpu.memory_space<vmem>>, vector<1x9xf32>
    %25 = vector.broadcast %24 : vector<1x9xf32> to vector<16x9xf32>
    %26 = arith.addf %23, %25 : vector<16x9xf32>
    %c0_23 = arith.constant 0 : index
    %c0_24 = arith.constant 0 : index
    %27 = vector.load %arg10[%c0_23, %c0_24] : memref<16x9xf32, #tpu.memory_space<vmem>>, vector<16x9xf32>
    tpu.vector_store %arg10[%c0_23, %c0_24], %26 {strides = array<i32>} : memref<16x9xf32, #tpu.memory_space<vmem>>, vector<16x9xf32>,
    return
  }
  func.func @transform_0(%arg0: i32) -> (i32, i32) {
    %c0_i32 = arith.constant 0 : i32
    %c0_i32_0 = arith.constant 0 : i32
    return %arg0, %c0_i32 : i32, i32
  }
  func.func @transform_1(%arg0: i32) -> (i32, i32) {
    %c0_i32 = arith.constant 0 : i32
    %c0_i32_0 = arith.constant 0 : i32
    %c0_i32_1 = arith.constant 0 : i32
    return %c0_i32, %c0_i32_0 : i32, i32
  }
  func.func @transform_2(%arg0: i32) -> (i32, i32) {
    %c0_i32 = arith.constant 0 : i32
    %c0_i32_0 = arith.constant 0 : i32
    %c0_i32_1 = arith.constant 0 : i32
    return %c0_i32, %c0_i32_0 : i32, i32
  }
  func.func @transform_3(%arg0: i32) -> (i32, i32) {
    %c0_i32 = arith.constant 0 : i32
    %c0_i32_0 = arith.constant 0 : i32
    %c0_i32_1 = arith.constant 0 : i32
    return %c0_i32, %c0_i32_0 : i32, i32
  }
  func.func @transform_4(%arg0: i32) -> (i32, i32) {
    %c0_i32 = arith.constant 0 : i32
    %c0_i32_0 = arith.constant 0 : i32
    %c0_i32_1 = arith.constant 0 : i32
    return %c0_i32, %c0_i32_0 : i32, i32
  }
  func.func @transform_5(%arg0: i32) -> (i32, i32) {
    %c0_i32 = arith.constant 0 : i32
    %c0_i32_0 = arith.constant 0 : i32
    %c0_i32_1 = arith.constant 0 : i32
    return %c0_i32, %c0_i32_0 : i32, i32
  }
  func.func @transform_6(%arg0: i32) -> (i32, i32) {
    %c0_i32 = arith.constant 0 : i32
    %c0_i32_0 = arith.constant 0 : i32
    %c0_i32_1 = arith.constant 0 : i32
    return %c0_i32, %c0_i32_0 : i32, i32
  }
  func.func @transform_7(%arg0: i32) -> (i32, i32) {
    %c0_i32 = arith.constant 0 : i32
    %c0_i32_0 = arith.constant 0 : i32
    %c0_i32_1 = arith.constant 0 : i32
    return %c0_i32, %c0_i32_0 : i32, i32
  }
  func.func @transform_8(%arg0: i32) -> (i32, i32) {
    %c0_i32 = arith.constant 0 : i32
    %c0_i32_0 = arith.constant 0 : i32
    %c0_i32_1 = arith.constant 0 : i32
    return %c0_i32, %c0_i32_0 : i32, i32
  }
  func.func @transform_9(%arg0: i32) -> (i32, i32) {
    %c0_i32 = arith.constant 0 : i32
    %c0_i32_0 = arith.constant 0 : i32
    return %arg0, %c0_i32 : i32, i32
  }
}

</mosaic_0001>

<llo_original>
// kernel: net_forward.1
$region0: #{net_forward.1}
  #allocation0 [shape = 'u32[]', space=smem, size = 0x4, offset = 0x4, fixed_abs, tag = 'smem constant byte address 0x4 - core index']
  #allocation1 [shape = 'u32[144,128]{1,0:T(1,128)}', space=vmem, size = 0x12000, scoped, tag = 'internal scratch']
  %s0 = inlined_call_operand.vmem [shape: f32[16,93], index: 0, kind: input, shape index: {}]
  %s1 = inlined_call_operand.vmem [shape: f32[93,64], index: 1, kind: input, shape index: {}]
  %s2 = inlined_call_operand.vmem [shape: f32[1,64], index: 2, kind: input, shape index: {}]
  %s3 = inlined_call_operand.vmem [shape: f32[64,32], index: 3, kind: input, shape index: {}]
  %s4 = inlined_call_operand.vmem [shape: f32[1,32], index: 4, kind: input, shape index: {}]
  %s5 = inlined_call_operand.vmem [shape: f32[32,16], index: 5, kind: input, shape index: {}]
  %s6 = inlined_call_operand.vmem [shape: f32[1,16], index: 6, kind: input, shape index: {}]
  %s7 = inlined_call_operand.vmem [shape: f32[16,9], index: 7, kind: input, shape index: {}]
  %s8 = inlined_call_operand.vmem [shape: f32[1,9], index: 8, kind: input, shape index: {}]
  %s9 = inlined_call_operand.hbm [shape: f32[16,9], index: 9, kind: output, shape index: {}]
  %s10 = sld [smem:[#allocation0]]
  $region46: #{net_forward.1} parent=0
    _
  %s12 = ssub.s32 1, %s10
  %s13 = scalar_select 0, %s12, %s10
  $region1: #{net_forward.1} parent=0
    #allocation2 [shape = 'u8[8192]{0}', space=vmem, size = 0x2000, scoped, tag = 'output window, operand 0, single buffered']
    #allocation3 [shape = 's32[1]{0}', space=sflag, size = 0x4, scoped, tag = 'scoped memory for net_forward.1']
    %14 = vsyncpa [#allocation3], 0
    // Predicated region
    $region2: #{net_forward.1} parent=1 // pred_check
      _
    $region3: #{net_forward.1} parent=1 // pred_check_branch
      %16 = sbr.rel (0) target = $region5
    $region4: #{net_forward.1} parent=1 // pred_region
      _
    $region5: #{net_forward.1} parent=1 // pred_fallthru
      _
    // Predicated region
    $region6: #{net_forward.1} parent=1 // pred_check
      _
    $region7: #{net_forward.1} parent=1 // pred_check_branch
      %18 = sbr.rel (0) target = $region9
    $region8: #{net_forward.1} parent=1 // pred_region
      _
    $region9: #{net_forward.1} parent=1 // pred_fallthru
      _
    // Predicated region
    $region10: #{net_forward.1} parent=1 // pred_check
      _
    $region11: #{net_forward.1} parent=1 // pred_check_branch
      %20 = sbr.rel (0) target = $region13
    $region12: #{net_forward.1} parent=1 // pred_region
      _
    $region13: #{net_forward.1} parent=1 // pred_fallthru
      _
    // Predicated region
    $region14: #{net_forward.1} parent=1 // pred_check
      _
    $region15: #{net_forward.1} parent=1 // pred_check_branch
      %22 = sbr.rel (0) target = $region17
    $region16: #{net_forward.1} parent=1 // pred_region
      _
    $region17: #{net_forward.1} parent=1 // pred_fallthru
      _
    // Predicated region
    $region18: #{net_forward.1} parent=1 // pred_check
      _
    $region19: #{net_forward.1} parent=1 // pred_check_branch
      %24 = sbr.rel (0) target = $region21
    $region20: #{net_forward.1} parent=1 // pred_region
      _
    $region21: #{net_forward.1} parent=1 // pred_fallthru
      _
    // Predicated region
    $region22: #{net_forward.1} parent=1 // pred_check
      _
    $region23: #{net_forward.1} parent=1 // pred_check_branch
      %26 = sbr.rel (0) target = $region25
    $region24: #{net_forward.1} parent=1 // pred_region
      _
    $region25: #{net_forward.1} parent=1 // pred_fallthru
      _
    // Predicated region
    $region26: #{net_forward.1} parent=1 // pred_check
      _
    $region27: #{net_forward.1} parent=1 // pred_check_branch
      %28 = sbr.rel (0) target = $region29
    $region28: #{net_forward.1} parent=1 // pred_region
      _
    $region29: #{net_forward.1} parent=1 // pred_fallthru
      _
    // Predicated region
    $region30: #{net_forward.1} parent=1 // pred_check
      _
    $region31: #{net_forward.1} parent=1 // pred_check_branch
      %30 = sbr.rel (0) target = $region33
    $region32: #{net_forward.1} parent=1 // pred_region
      _
    $region33: #{net_forward.1} parent=1 // pred_fallthru
      _
    // Predicated region
    $region34: #{net_forward.1} parent=1 // pred_check
      _
    $region35: #{net_forward.1} parent=1 // pred_check_branch
      %32 = sbr.rel (0) target = $region37
    $region36: #{net_forward.1} parent=1 // pred_region
      _
    $region37: #{net_forward.1} parent=1 // pred_fallthru
      _
    %v33 = vld [vmem:[%s0] sm:$0xff]
    %v34 = vld [vmem:[%s0 + $0x8] sm:$0xff]
    %v35 = vld [vmem:[%s1] sm:$0xff]
    %v36 = vld [vmem:[%s1 + $0x8] sm:$0xff]
    %v37 = vld [vmem:[%s1 + $0x10] sm:$0xff]
    %v38 = vld [vmem:[%s1 + $0x18] sm:$0xff]
    %v39 = vld [vmem:[%s1 + $0x20] sm:$0xff]
    %v40 = vld [vmem:[%s1 + $0x28] sm:$0xff]
    %v41 = vld [vmem:[%s1 + $0x30] sm:$0xff]
    %v42 = vld [vmem:[%s1 + $0x38] sm:$0xff]
    %v43 = vld [vmem:[%s1 + $0x40] sm:$0xff]
    %v44 = vld [vmem:[%s1 + $0x48] sm:$0xff]
    %v45 = vld [vmem:[%s1 + $0x50] sm:$0xff]
    %v46 = vld [vmem:[%s1 + $0x58] sm:$0x1f]
    %v47 = vld [vmem:[%s2] sm:$0x1]
    %v49 = vlaneseq
    %v50 = vshrl.u32 %v49, 7
    %v51 = vsub.s32 0, %v50
    %v52 = vrot.slane %v47, %v51
    %vm54 = vcmask 760832
    %v56 = vsel %vm54, %v33, 0
    %v59 = vsel %vm54, %v34, 0
    %vm61 = vcmask 1044480
    %v63 = vsel %vm61, %v46, 0
    %65 = vmatprep.subr.mxu0 0.0
    %66 = vmatpush1.msra.mxu0 0.0
    %67 = vmatprep.subr.mxu0 0.0
    %68 = vmatpush1.msra.mxu0 0.0
    %69 = vmatprep.subr.mxu0 0.0
    %70 = vmatpush1.msra.mxu0 0.0
    %71 = vmatprep.subr.mxu0 0.0
    %72 = vmatpush1.msra.mxu0 0.0
    %73 = vmatprep.subr.mxu0 0.0
    %74 = vmatpush1.msra.mxu0 %v63
    %75 = vmatprep.subr.mxu0 0.0
    %76 = vmatpush1.msra.mxu0 %v45
    %77 = vmatprep.subr.mxu0 0.0
    %78 = vmatpush1.msra.mxu0 %v44
    %79 = vmatprep.subr.mxu0 0.0
    %80 = vmatpush1.msra.mxu0 %v43
    %81 = vmatprep.subr.mxu0 0.0
    %82 = vmatpush1.msra.mxu0 %v42
    %83 = vmatprep.subr.mxu0 0.0
    %84 = vmatpush1.msra.mxu0 %v41
    %85 = vmatprep.subr.mxu0 0.0
    %86 = vmatpush1.msra.mxu0 %v40
    %87 = vmatprep.subr.mxu0 0.0
    %88 = vmatpush1.msra.mxu0 %v39
    %89 = vmatprep.subr.mxu0 0.0
    %90 = vmatpush1.msra.mxu0 %v38
    %91 = vmatprep.subr.mxu0 0.0
    %92 = vmatpush1.msra.mxu0 %v37
    %93 = vmatprep.subr.mxu0 0.0
    %94 = vmatpush1.msra.mxu0 %v36
    %95 = vmatprep.subr.mxu0 0.0
    %96 = vmatpush1.msra.mxu0 %v35
    %97 = vmatprep.subr.mxu0 0.0
    %98 = vmatpush2.msra.mxu0 0.0
    %99 = vmatprep.subr.mxu0 0.0
    %100 = vmatpush2.msra.mxu0 0.0
    %101 = vmatprep.subr.mxu0 0.0
    %102 = vmatpush2.msra.mxu0 0.0
    %103 = vmatprep.subr.mxu0 0.0
    %104 = vmatpush2.msra.mxu0 0.0
    %105 = vmatprep.subr.mxu0 0.0
    %106 = vmatpush2.msra.mxu0 0.0
    %107 = vmatprep.subr.mxu0 0.0
    %108 = vmatpush2.msra.mxu0 0.0
    %109 = vmatprep.subr.mxu0 0.0
    %110 = vmatpush2.msra.mxu0 0.0
    %111 = vmatprep.subr.mxu0 0.0
    %112 = vmatpush2.msra.mxu0 0.0
    %113 = vmatprep.subr.mxu0 0.0
    %114 = vmatpush2.msra.mxu0 0.0
    %115 = vmatprep.subr.mxu0 0.0
    %116 = vmatpush2.msra.mxu0 0.0
    %117 = vmatprep.subr.mxu0 0.0
    %118 = vmatpush2.msra.mxu0 0.0
    %119 = vmatprep.subr.mxu0 0.0
    %120 = vmatpush2.msra.mxu0 0.0
    %121 = vmatprep.subr.mxu0 0.0
    %122 = vmatpush2.msra.mxu0 0.0
    %123 = vmatprep.subr.mxu0 0.0
    %124 = vmatpush2.msra.mxu0 0.0
    %125 = vmatprep.subr.mxu0 0.0
    %126 = vmatpush2.msra.mxu0 0.0
    %127 = vmatprep.subr.mxu0 0.0
    %128 = vmatpush2.msra.mxu0 0.0
    %129 = vmatprep.mubr.f32.mxu0 0.0
    %130 = vmatmul.mubr.f32.gmra.mxu0 %v56
    %v131 = vpop.f32.mrf.mxu0
    %v132 = vadd.f32 %v52, %v131
    %v133 = vpop.f32.mrf.mxu0
    %134 = vmatprep.mubr.f32.mxu0 0.0
    %135 = vmatmul.mubr.f32.gmra.mxu0 %v59
    %v136 = vpop.f32.mrf.mxu0
    %v137 = vadd.f32 %v52, %v136
    %v138 = vpop.f32.mrf.mxu0
    %139 = vdwg.mxu0
    %v140 = vmax.f32 %v132, 0.0
    %v141 = vmax.f32 %v137, 0.0
    %v142 = vld [vmem:[%s3] sm:$0xff]
    %v143 = vld [vmem:[%s3 + $0x8] sm:$0xff]
    %v144 = vld [vmem:[%s3 + $0x10] sm:$0xff]
    %v145 = vld [vmem:[%s3 + $0x18] sm:$0xff]
    %v146 = vld [vmem:[%s3 + $0x20] sm:$0xff]
    %v147 = vld [vmem:[%s3 + $0x28] sm:$0xff]
    %v148 = vld [vmem:[%s3 + $0x30] sm:$0xff]
    %v149 = vld [vmem:[%s3 + $0x38] sm:$0xff]
    %v150 = vld [vmem:[%s4] sm:$0x1]
    %v152 = vlaneseq
    %v153 = vshrl.u32 %v152, 7
    %v154 = vsub.s32 0, %v153
    %v155 = vrot.slane %v150, %v154
    %vm157 = vcmask 523264
    %v159 = vsel %vm157, %v140, 0
    %v162 = vsel %vm157, %v141, 0
    %164 = vmatprep.subr.mxu0 0.0
    %165 = vmatpush1.msra.mxu0 0.0
    %166 = vmatprep.subr.mxu0 0.0
    %167 = vmatpush1.msra.mxu0 0.0
    %168 = vmatprep.subr.mxu0 0.0
    %169 = vmatpush1.msra.mxu0 0.0
    %170 = vmatprep.subr.mxu0 0.0
    %171 = vmatpush1.msra.mxu0 0.0
    %172 = vmatprep.subr.mxu0 0.0
    %173 = vmatpush1.msra.mxu0 0.0
    %174 = vmatprep.subr.mxu0 0.0
    %175 = vmatpush1.msra.mxu0 0.0
    %176 = vmatprep.subr.mxu0 0.0
    %177 = vmatpush1.msra.mxu0 0.0
    %178 = vmatprep.subr.mxu0 0.0
    %179 = vmatpush1.msra.mxu0 0.0
    %180 = vmatprep.subr.mxu0 0.0
    %181 = vmatpush1.msra.mxu0 %v149
    %182 = vmatprep.subr.mxu0 0.0
    %183 = vmatpush1.msra.mxu0 %v148
    %184 = vmatprep.subr.mxu0 0.0
    %185 = vmatpush1.msra.mxu0 %v147
    %186 = vmatprep.subr.mxu0 0.0
    %187 = vmatpush1.msra.mxu0 %v146
    %188 = vmatprep.subr.mxu0 0.0
    %189 = vmatpush1.msra.mxu0 %v145
    %190 = vmatprep.subr.mxu0 0.0
    %191 = vmatpush1.msra.mxu0 %v144
    %192 = vmatprep.subr.mxu0 0.0
    %193 = vmatpush1.msra.mxu0 %v143
    %194 = vmatprep.subr.mxu0 0.0
    %195 = vmatpush1.msra.mxu0 %v142
    %196 = vmatprep.subr.mxu0 0.0
    %197 = vmatpush2.msra.mxu0 0.0
    %198 = vmatprep.subr.mxu0 0.0
    %199 = vmatpush2.msra.mxu0 0.0
    %200 = vmatprep.subr.mxu0 0.0
    %201 = vmatpush2.msra.mxu0 0.0
    %202 = vmatprep.subr.mxu0 0.0
    %203 = vmatpush2.msra.mxu0 0.0
    %204 = vmatprep.subr.mxu0 0.0
    %205 = vmatpush2.msra.mxu0 0.0
    %206 = vmatprep.subr.mxu0 0.0
    %207 = vmatpush2.msra.mxu0 0.0
    %208 = vmatprep.subr.mxu0 0.0
    %209 = vmatpush2.msra.mxu0 0.0
    %210 = vmatprep.subr.mxu0 0.0
    %211 = vmatpush2.msra.mxu0 0.0
    %212 = vmatprep.subr.mxu0 0.0
    %213 = vmatpush2.msra.mxu0 0.0
    %214 = vmatprep.subr.mxu0 0.0
    %215 = vmatpush2.msra.mxu0 0.0
    %216 = vmatprep.subr.mxu0 0.0
    %217 = vmatpush2.msra.mxu0 0.0
    %218 = vmatprep.subr.mxu0 0.0
    %219 = vmatpush2.msra.mxu0 0.0
    %220 = vmatprep.subr.mxu0 0.0
    %221 = vmatpush2.msra.mxu0 0.0
    %222 = vmatprep.subr.mxu0 0.0
    %223 = vmatpush2.msra.mxu0 0.0
    %224 = vmatprep.subr.mxu0 0.0
    %225 = vmatpush2.msra.mxu0 0.0
    %226 = vmatprep.subr.mxu0 0.0
    %227 = vmatpush2.msra.mxu0 0.0
    %228 = vmatprep.mubr.f32.mxu0 0.0
    %229 = vmatmul.mubr.f32.gmra.mxu0 %v159
    %v230 = vpop.f32.mrf.mxu0
    %v231 = vadd.f32 %v155, %v230
    %v232 = vpop.f32.mrf.mxu0
    %233 = vmatprep.mubr.f32.mxu0 0.0
    %234 = vmatmul.mubr.f32.gmra.mxu0 %v162
    %v235 = vpop.f32.mrf.mxu0
    %v236 = vadd.f32 %v155, %v235
    %v237 = vpop.f32.mrf.mxu0
    %238 = vdwg.mxu0
    %v239 = vmax.f32 %v231, 0.0
    %v240 = vmax.f32 %v236, 0.0
    %v241 = vld [vmem:[%s5] sm:$0xff]
    %v242 = vld [vmem:[%s5 + $0x8] sm:$0xff]
    %v243 = vld [vmem:[%s5 + $0x10] sm:$0xff]
    %v244 = vld [vmem:[%s5 + $0x18] sm:$0xff]
    %v245 = vld [vmem:[%s6] sm:$0x1]
    %v247 = vlaneseq
    %v248 = vshrl.u32 %v247, 7
    %v249 = vsub.s32 0, %v248
    %v250 = vrot.slane %v245, %v249
    %vm252 = vcmask 261120
    %v254 = vsel %vm252, %v239, 0
    %v257 = vsel %vm252, %v240, 0
    %259 = vmatprep.subr.mxu0 0.0
    %260 = vmatpush1.msra.mxu0 0.0
    %261 = vmatprep.subr.mxu0 0.0
    %262 = vmatpush1.msra.mxu0 0.0
    %263 = vmatprep.subr.mxu0 0.0
    %264 = vmatpush1.msra.mxu0 0.0
    %265 = vmatprep.subr.mxu0 0.0
    %266 = vmatpush1.msra.mxu0 0.0
    %267 = vmatprep.subr.mxu0 0.0
    %268 = vmatpush1.msra.mxu0 0.0
    %269 = vmatprep.subr.mxu0 0.0
    %270 = vmatpush1.msra.mxu0 0.0
    %271 = vmatprep.subr.mxu0 0.0
    %272 = vmatpush1.msra.mxu0 0.0
    %273 = vmatprep.subr.mxu0 0.0
    %274 = vmatpush1.msra.mxu0 0.0
    %275 = vmatprep.subr.mxu0 0.0
    %276 = vmatpush1.msra.mxu0 0.0
    %277 = vmatprep.subr.mxu0 0.0
    %278 = vmatpush1.msra.mxu0 0.0
    %279 = vmatprep.subr.mxu0 0.0
    %280 = vmatpush1.msra.mxu0 0.0
    %281 = vmatprep.subr.mxu0 0.0
    %282 = vmatpush1.msra.mxu0 0.0
    %283 = vmatprep.subr.mxu0 0.0
    %284 = vmatpush1.msra.mxu0 %v244
    %285 = vmatprep.subr.mxu0 0.0
    %286 = vmatpush1.msra.mxu0 %v243
    %287 = vmatprep.subr.mxu0 0.0
    %288 = vmatpush1.msra.mxu0 %v242
    %289 = vmatprep.subr.mxu0 0.0
    %290 = vmatpush1.msra.mxu0 %v241
    %291 = vmatprep.subr.mxu0 0.0
    %292 = vmatpush2.msra.mxu0 0.0
    %293 = vmatprep.subr.mxu0 0.0
    %294 = vmatpush2.msra.mxu0 0.0
    %295 = vmatprep.subr.mxu0 0.0
    %296 = vmatpush2.msra.mxu0 0.0
    %297 = vmatprep.subr.mxu0 0.0
    %298 = vmatpush2.msra.mxu0 0.0
    %299 = vmatprep.subr.mxu0 0.0
    %300 = vmatpush2.msra.mxu0 0.0
    %301 = vmatprep.subr.mxu0 0.0
    %302 = vmatpush2.msra.mxu0 0.0
    %303 = vmatprep.subr.mxu0 0.0
    %304 = vmatpush2.msra.mxu0 0.0
    %305 = vmatprep.subr.mxu0 0.0
    %306 = vmatpush2.msra.mxu0 0.0
    %307 = vmatprep.subr.mxu0 0.0
    %308 = vmatpush2.msra.mxu0 0.0
    %309 = vmatprep.subr.mxu0 0.0
    %310 = vmatpush2.msra.mxu0 0.0
    %311 = vmatprep.subr.mxu0 0.0
    %312 = vmatpush2.msra.mxu0 0.0
    %313 = vmatprep.subr.mxu0 0.0
    %314 = vmatpush2.msra.mxu0 0.0
    %315 = vmatprep.subr.mxu0 0.0
    %316 = vmatpush2.msra.mxu0 0.0
    %317 = vmatprep.subr.mxu0 0.0
    %318 = vmatpush2.msra.mxu0 0.0
    %319 = vmatprep.subr.mxu0 0.0
    %320 = vmatpush2.msra.mxu0 0.0
    %321 = vmatprep.subr.mxu0 0.0
    %322 = vmatpush2.msra.mxu0 0.0
    %323 = vmatprep.mubr.f32.mxu0 0.0
    %324 = vmatmul.mubr.f32.gmra.mxu0 %v254
    %v325 = vpop.f32.mrf.mxu0
    %v326 = vadd.f32 %v250, %v325
    %v327 = vpop.f32.mrf.mxu0
    %328 = vmatprep.mubr.f32.mxu0 0.0
    %329 = vmatmul.mubr.f32.gmra.mxu0 %v257
    %v330 = vpop.f32.mrf.mxu0
    %v331 = vadd.f32 %v250, %v330
    %v332 = vpop.f32.mrf.mxu0
    %333 = vdwg.mxu0
    %v334 = vmax.f32 %v326, 0.0
    %v335 = vmax.f32 %v331, 0.0
    %v336 = vld [vmem:[%s7] sm:$0xff]
    %v337 = vld [vmem:[%s7 + $0x8] sm:$0xff]
    %v338 = vld [vmem:[%s8] sm:$0x1]
    %v340 = vlaneseq
    %v341 = vshrl.u32 %v340, 7
    %v342 = vsub.s32 0, %v341
    %v343 = vrot.slane %v338, %v342
    %vm345 = vcmask 130048
    %v347 = vsel %vm345, %v334, 0
    %v350 = vsel %vm345, %v335, 0
    %352 = vmatprep.subr.mxu0 0.0
    %353 = vmatpush1.msra.mxu0 0.0
    %354 = vmatprep.subr.mxu0 0.0
    %355 = vmatpush1.msra.mxu0 0.0
    %356 = vmatprep.subr.mxu0 0.0
    %357 = vmatpush1.msra.mxu0 0.0
    %358 = vmatprep.subr.mxu0 0.0
    %359 = vmatpush1.msra.mxu0 0.0
    %360 = vmatprep.subr.mxu0 0.0
    %361 = vmatpush1.msra.mxu0 0.0
    %362 = vmatprep.subr.mxu0 0.0
    %363 = vmatpush1.msra.mxu0 0.0
    %364 = vmatprep.subr.mxu0 0.0
    %365 = vmatpush1.msra.mxu0 0.0
    %366 = vmatprep.subr.mxu0 0.0
    %367 = vmatpush1.msra.mxu0 0.0
    %368 = vmatprep.subr.mxu0 0.0
    %369 = vmatpush1.msra.mxu0 0.0
    %370 = vmatprep.subr.mxu0 0.0
    %371 = vmatpush1.msra.mxu0 0.0
    %372 = vmatprep.subr.mxu0 0.0
    %373 = vmatpush1.msra.mxu0 0.0
    %374 = vmatprep.subr.mxu0 0.0
    %375 = vmatpush1.msra.mxu0 0.0
    %376 = vmatprep.subr.mxu0 0.0
    %377 = vmatpush1.msra.mxu0 0.0
    %378 = vmatprep.subr.mxu0 0.0
    %379 = vmatpush1.msra.mxu0 0.0
    %380 = vmatprep.subr.mxu0 0.0
    %381 = vmatpush1.msra.mxu0 %v337
    %382 = vmatprep.subr.mxu0 0.0
    %383 = vmatpush1.msra.mxu0 %v336
    %384 = vmatprep.subr.mxu0 0.0
    %385 = vmatpush2.msra.mxu0 0.0
    %386 = vmatprep.subr.mxu0 0.0
    %387 = vmatpush2.msra.mxu0 0.0
    %388 = vmatprep.subr.mxu0 0.0
    %389 = vmatpush2.msra.mxu0 0.0
    %390 = vmatprep.subr.mxu0 0.0
    %391 = vmatpush2.msra.mxu0 0.0
    %392 = vmatprep.subr.mxu0 0.0
    %393 = vmatpush2.msra.mxu0 0.0
    %394 = vmatprep.subr.mxu0 0.0
    %395 = vmatpush2.msra.mxu0 0.0
    %396 = vmatprep.subr.mxu0 0.0
    %397 = vmatpush2.msra.mxu0 0.0
    %398 = vmatprep.subr.mxu0 0.0
    %399 = vmatpush2.msra.mxu0 0.0
    %400 = vmatprep.subr.mxu0 0.0
    %401 = vmatpush2.msra.mxu0 0.0
    %402 = vmatprep.subr.mxu0 0.0
    %403 = vmatpush2.msra.mxu0 0.0
    %404 = vmatprep.subr.mxu0 0.0
    %405 = vmatpush2.msra.mxu0 0.0
    %406 = vmatprep.subr.mxu0 0.0
    %407 = vmatpush2.msra.mxu0 0.0
    %408 = vmatprep.subr.mxu0 0.0
    %409 = vmatpush2.msra.mxu0 0.0
    %410 = vmatprep.subr.mxu0 0.0
    %411 = vmatpush2.msra.mxu0 0.0
    %412 = vmatprep.subr.mxu0 0.0
    %413 = vmatpush2.msra.mxu0 0.0
    %414 = vmatprep.subr.mxu0 0.0
    %415 = vmatpush2.msra.mxu0 0.0
    %416 = vmatprep.mubr.f32.mxu0 0.0
    %417 = vmatmul.mubr.f32.gmra.mxu0 %v347
    %v418 = vpop.f32.mrf.mxu0
    %v419 = vadd.f32 %v343, %v418
    %v420 = vpop.f32.mrf.mxu0
    %421 = vmatprep.mubr.f32.mxu0 0.0
    %422 = vmatmul.mubr.f32.gmra.mxu0 %v350
    %v423 = vpop.f32.mrf.mxu0
    %v424 = vadd.f32 %v343, %v423
    %v425 = vpop.f32.mrf.mxu0
    %426 = vdwg.mxu0
    %vm427 = vcmask 72704
    %428 = vst.msk [vmem:[#allocation2] sm:$0xff] %vm427, %v419
    %429 = vst.msk [vmem:[#allocation2 + $0x8] sm:$0xff] %vm427, %v424
    // Predicated region
    $region38: #{net_forward.1} parent=1 // pred_check
      _
    $region39: #{net_forward.1} parent=1 // pred_check_branch
      %431 = sbr.rel (0) target = $region41
    $region40: #{net_forward.1} parent=1 // pred_region
      %s433 = ssub.s32 256, 256
      %434 = vsyncadd [#allocation3], %s433
      %s435 = sshll.u32 [#allocation2], 4
      %s436 = int_to_ptr.vmem [resolvable:$true] %s435
      %441 = dma.vmem_to_hbm [thread:$0]  %s436, 256, %s9, [#allocation3], 128, 128, 8
    $region41: #{net_forward.1} parent=1 // pred_fallthru
      _
    // Predicated region
    $region42: #{net_forward.1} parent=1 // pred_check
      _
    $region43: #{net_forward.1} parent=1 // pred_check_branch
      %443 = sbr.rel (0) target = $region45
    $region44: #{net_forward.1} parent=1 // pred_region
      %444 = dma.done [#allocation3], 256
    $region45: #{net_forward.1} parent=1 // pred_fallthru
      _
    %445 = vsyncpa [#allocation3], 1

</llo_original>
